<compile_context>
chip_gen: v7x
topology: tpu7x:2x2x1
jax: 0.10.0
libtpu: 0.0.40
codegen_flags: <defaults>
</compile_context>

<pallas_src>
import functools

import jax
import jax.numpy as jnp
from jax.experimental import pallas as pl
from jax.experimental.pallas import tpu as pltpu

LANE = 128


def _round_up(n, m):
    return ((n + m - 1) // m) * m


def _mlp_kernel(x_ref, w1_ref, b1_ref, w2_ref, b2_ref, wp_ref, bp_ref, o_ref,
                h1_ref, h2_ref):
    # x arrives f32; cast to bf16 in-kernel (free VPU work under the weight DMA).
    x = x_ref[...].astype(jnp.bfloat16)
    # fc1: bf16 matmul, f32 accumulate; bias + relu in f32.
    h1 = jnp.dot(x, w1_ref[...], preferred_element_type=jnp.float32)
    h1b = jnp.maximum(h1 + b1_ref[...], 0.0).astype(jnp.bfloat16)
    h1_ref[...] = h1b                       # bf16 spill home for the activation
    # fc2 (dominant matmul) consumes the freshly-cast value directly.
    h2 = jnp.dot(h1b, w2_ref[...], preferred_element_type=jnp.float32)
    h2b = jnp.maximum(h2 + b2_ref[...], 0.0).astype(jnp.bfloat16)
    h2_ref[...] = h2b
    # pi head; wp/bp are zero-padded on the lane axis to 128 -> unmasked store.
    out = jnp.dot(h2b, wp_ref[...], preferred_element_type=jnp.float32) + bp_ref[...]
    o_ref[...] = out.astype(o_ref.dtype)


def prepare_params(params):
    """One-time conversion of f32 params into the kernel layout (bf16 weights,
    f32 biases, pi head lane-padded to a multiple of 128)."""
    A = params["wp"].shape[1]
    A_pad = _round_up(A, LANE)
    return {
        "w1": params["w1"].astype(jnp.bfloat16),
        "b1": params["b1"].astype(jnp.float32).reshape(1, -1),
        "w2": params["w2"].astype(jnp.bfloat16),
        "b2": params["b2"].astype(jnp.float32).reshape(1, -1),
        "wp": jnp.pad(params["wp"].astype(jnp.bfloat16), ((0, 0), (0, A_pad - A))),
        "bp": jnp.pad(params["bp"].astype(jnp.float32).reshape(1, -1),
                      ((0, 0), (0, A_pad - A))),
    }


@functools.partial(jax.jit, static_argnames=("n_actions", "block_b", "out_dtype"))
def reinforce_net_forward(x, kparams, *, n_actions, block_b=None,
                          out_dtype=jnp.float32):
    """Forward pass of REINFORCE_Net.

    x: [B, input_dim] float32
    kparams: output of prepare_params()
    returns logits [B, n_actions] in out_dtype (default float32)
    """
    w1, b1 = kparams["w1"], kparams["b1"]
    w2, b2 = kparams["w2"], kparams["b2"]
    wp, bp = kparams["wp"], kparams["bp"]

    B, D = x.shape
    H = w1.shape[1]
    A_pad = wp.shape[1]

    # Batch tiling policy (see header).
    if block_b is None:
        if B <= 128:
            block_b = B
        elif B <= 1024:
            # >= 2 tiles so v7x's two TensorCores both get work; 8-row aligned.
            block_b = min(512, _round_up((B + 1) // 2, 8))
        else:
            block_b = 512
    B_pad = _round_up(B, block_b)
    x_p = x if B_pad == B else jnp.pad(x, ((0, B_pad - B), (0, 0)))

    grid = (B_pad // block_b,)

    out_padded = pl.pallas_call(
        _mlp_kernel,
        out_shape=jax.ShapeDtypeStruct((B_pad, A_pad), out_dtype),
        grid_spec=pltpu.PrefetchScalarGridSpec(
            num_scalar_prefetch=0,
            grid=grid,
            in_specs=[
                pl.BlockSpec((block_b, D), lambda i: (i, 0)),   # x tile (f32)
                pl.BlockSpec((D, H), lambda i: (0, 0)),         # w1 (bf16)
                pl.BlockSpec((1, H), lambda i: (0, 0)),         # b1 (f32)
                pl.BlockSpec((H, H), lambda i: (0, 0)),         # w2 (bf16)
                pl.BlockSpec((1, H), lambda i: (0, 0)),         # b2 (f32)
                pl.BlockSpec((H, A_pad), lambda i: (0, 0)),     # wp (bf16, lane-padded)
                pl.BlockSpec((1, A_pad), lambda i: (0, 0)),     # bp (f32, lane-padded)
            ],
            out_specs=pl.BlockSpec((block_b, A_pad), lambda i: (i, 0)),
            scratch_shapes=[
                pltpu.VMEM((block_b, H), jnp.bfloat16),  # h1
                pltpu.VMEM((block_b, H), jnp.bfloat16),  # h2
            ],
        ),
        compiler_params=pltpu.CompilerParams(
            dimension_semantics=("parallel",),
        ),
    )(x_p, w1, b1, w2, b2, wp, bp)

    return out_padded[:B, :n_actions]


def init_params(key, input_dim, n_actions, hidden=256, dtype=jnp.float32):
    """Deterministic init mimicking PyTorch Linear default (U(+-1/sqrt(fan_in)))."""
    ks = jax.random.split(key, 6)

    def u(k, shape, fan_in):
        bound = 1.0 / jnp.sqrt(fan_in)
        return jax.random.uniform(k, shape, dtype, minval=-bound, maxval=bound)

    return {
        "w1": u(ks[0], (input_dim, hidden), input_dim),
        "b1": u(ks[1], (1, hidden), input_dim),
        "w2": u(ks[2], (hidden, hidden), hidden),
        "b2": u(ks[3], (1, hidden), hidden),
        "wp": u(ks[4], (hidden, n_actions), hidden),
        "bp": u(ks[5], (1, n_actions), hidden),
    }


def _reference_forward_f32(x, params):
    h1 = jnp.maximum(x @ params["w1"] + params["b1"], 0.0)
    h2 = jnp.maximum(h1 @ params["w2"] + params["b2"], 0.0)
    return h2 @ params["wp"] + params["bp"]


def _reference_forward_bf16(x, params):
    """Reference with the same bf16-matmul / f32-accumulate recipe as the kernel."""
    w1 = params["w1"].astype(jnp.bfloat16)
    w2 = params["w2"].astype(jnp.bfloat16)
    wp = params["wp"].astype(jnp.bfloat16)
    h1 = jnp.maximum(
        jnp.dot(x.astype(jnp.bfloat16), w1, preferred_element_type=jnp.float32)
        + params["b1"], 0.0)
    h2 = jnp.maximum(
        jnp.dot(h1.astype(jnp.bfloat16), w2, preferred_element_type=jnp.float32)
        + params["b2"], 0.0)
    return (jnp.dot(h2.astype(jnp.bfloat16), wp, preferred_element_type=jnp.float32)
            + params["bp"])


if __name__ == "__main__":
    input_dim = 16
    n_actions = 4
    batch = 8

    key = jax.random.PRNGKey(0)
    k_x, k_p = jax.random.split(key)

    params = init_params(k_p, input_dim, n_actions)
    kparams = prepare_params(params)  # one-time cast/pad, outside the hot path

    # Main case: small RL batch -> single un-gridded invocation.
    x = jax.random.normal(k_x, (batch, input_dim), jnp.float32)
    out = jax.block_until_ready(reinforce_net_forward(x, kparams, n_actions=n_actions))
    assert out.shape == (batch, n_actions), out.shape
    assert out.dtype == jnp.float32, out.dtype

    ref_bf16 = _reference_forward_bf16(x, params)
    ref_f32 = _reference_forward_f32(x, params)
    assert jnp.allclose(out, ref_bf16, atol=1e-3, rtol=1e-3), "mismatch vs bf16 reference"
    assert jnp.allclose(out, ref_f32, atol=5e-2, rtol=5e-2), "mismatch vs f32 reference"

    # Ragged batch with explicit small tile (grid > 1, batch padding path).
    x2 = jax.random.normal(k_x, (10, input_dim), jnp.float32)
    out2 = jax.block_until_ready(
        reinforce_net_forward(x2, kparams, n_actions=n_actions, block_b=8))
    assert out2.shape == (10, n_actions), out2.shape
    assert jnp.allclose(out2, _reference_forward_bf16(x2, params), atol=1e-3, rtol=1e-3), \
        "mismatch vs bf16 reference (tiled/ragged path)"

    # Mid-size batch with the automatic >=2-tile policy (v7x dual-TC path),
    # bf16 logits to halve the padded writeback.
    x3 = jax.random.normal(k_x, (192, input_dim), jnp.float32)
    out3 = jax.block_until_ready(
        reinforce_net_forward(x3, kparams, n_actions=n_actions, out_dtype=jnp.bfloat16))
    assert out3.shape == (192, n_actions), out3.shape
    assert jnp.allclose(out3.astype(jnp.float32), _reference_forward_bf16(x3, params),
                        atol=2e-2, rtol=2e-2), "mismatch vs bf16 reference (auto-tiled path)"

    print("KERNEL_OK")
</pallas_src>

<mosaic_0001>
module attributes {stable_mosaic.version = 11 : i64} {
  func.func @_mlp_kernel(%arg0: i32, %arg1: memref<8x16xf32, #tpu.memory_space<vmem>>, %arg2: memref<16x256xbf16, #tpu.memory_space<vmem>>, %arg3: memref<1x256xf32, #tpu.memory_space<vmem>>, %arg4: memref<256x256xbf16, #tpu.memory_space<vmem>>, %arg5: memref<1x256xf32, #tpu.memory_space<vmem>>, %arg6: memref<256x128xbf16, #tpu.memory_space<vmem>>, %arg7: memref<1x128xf32, #tpu.memory_space<vmem>>, %arg8: memref<8x128xf32, #tpu.memory_space<vmem>>, %arg9: memref<8x256xbf16, #tpu.memory_space<vmem>>, %arg10: memref<8x256xbf16, #tpu.memory_space<vmem>>) attributes {dimension_semantics = [#tpu.dimension_semantics<parallel>], iteration_bounds = array<i64: 1>, scalar_prefetch = 0 : i64, scratch_operands = 2 : i64, tpu.core_type = #tpu.core_type<tc>, window_params = [{transform_indices = @transform_0, window_bounds = array<i64: 8, 16>}, {pipeline_mode = #tpu.pipeline_mode<synchronous>, transform_indices = @transform_1, window_bounds = array<i64: 16, 256>}, {pipeline_mode = #tpu.pipeline_mode<synchronous>, transform_indices = @transform_2, window_bounds = array<i64: 1, 256>}, {pipeline_mode = #tpu.pipeline_mode<synchronous>, transform_indices = @transform_3, window_bounds = array<i64: 256, 256>}, {pipeline_mode = #tpu.pipeline_mode<synchronous>, transform_indices = @transform_4, window_bounds = array<i64: 1, 256>}, {pipeline_mode = #tpu.pipeline_mode<synchronous>, transform_indices = @transform_5, window_bounds = array<i64: 256, 128>}, {pipeline_mode = #tpu.pipeline_mode<synchronous>, transform_indices = @transform_6, window_bounds = array<i64: 1, 128>}, {transform_indices = @transform_7, window_bounds = array<i64: 8, 128>}]} {
    %c0 = arith.constant 0 : index
    %c0_0 = arith.constant 0 : index
    %0 = vector.load %arg1[%c0, %c0_0] : memref<8x16xf32, #tpu.memory_space<vmem>>, vector<8x16xf32>
    %1 = arith.truncf %0 : vector<8x16xf32> to vector<8x16xbf16>
    %c0_1 = arith.constant 0 : index
    %c0_2 = arith.constant 0 : index
    %2 = vector.load %arg2[%c0_1, %c0_2] : memref<16x256xbf16, #tpu.memory_space<vmem>>, vector<16x256xbf16>
    %cst = arith.constant dense<0.000000e+00> : vector<8x256xf32>
    %3 = tpu.matmul %1, %2, %cst {dimension_numbers = #tpu.dot_dimension_numbers<[1], [0], [0], [1], [0, 0, 1, 1], [], []>} : vector<8x16xbf16>, vector<16x256xbf16>, vector<8x256xf32> -> vector<8x256xf32>
    %c0_3 = arith.constant 0 : index
    %c0_4 = arith.constant 0 : index
    %4 = vector.load %arg3[%c0_3, %c0_4] : memref<1x256xf32, #tpu.memory_space<vmem>>, vector<1x256xf32>
    %5 = vector.broadcast %4 : vector<1x256xf32> to vector<8x256xf32>
    %6 = arith.addf %3, %5 : vector<8x256xf32>
    %cst_5 = arith.constant 0.000000e+00 : f32
    %7 = vector.broadcast %cst_5 : f32 to vector<8x256xf32>
    %8 = arith.maximumf %6, %7 : vector<8x256xf32>
    %9 = arith.truncf %8 : vector<8x256xf32> to vector<8x256xbf16>
    %c0_6 = arith.constant 0 : index
    %c0_7 = arith.constant 0 : index
    %10 = vector.load %arg9[%c0_6, %c0_7] : memref<8x256xbf16, #tpu.memory_space<vmem>>, vector<8x256xbf16>
    tpu.vector_store %arg9[%c0_6, %c0_7], %9 {strides = array<i32>} : memref<8x256xbf16, #tpu.memory_space<vmem>>, vector<8x256xbf16>,
    %c0_8 = arith.constant 0 : index
    %c0_9 = arith.constant 0 : index
    %11 = vector.load %arg4[%c0_8, %c0_9] : memref<256x256xbf16, #tpu.memory_space<vmem>>, vector<256x256xbf16>
    %cst_10 = arith.constant dense<0.000000e+00> : vector<8x256xf32>
    %12 = tpu.matmul %9, %11, %cst_10 {dimension_numbers = #tpu.dot_dimension_numbers<[1], [0], [0], [1], [0, 0, 1, 1], [], []>} : vector<8x256xbf16>, vector<256x256xbf16>, vector<8x256xf32> -> vector<8x256xf32>
    %c0_11 = arith.constant 0 : index
    %c0_12 = arith.constant 0 : index
    %13 = vector.load %arg5[%c0_11, %c0_12] : memref<1x256xf32, #tpu.memory_space<vmem>>, vector<1x256xf32>
    %14 = vector.broadcast %13 : vector<1x256xf32> to vector<8x256xf32>
    %15 = arith.addf %12, %14 : vector<8x256xf32>
    %cst_13 = arith.constant 0.000000e+00 : f32
    %16 = vector.broadcast %cst_13 : f32 to vector<8x256xf32>
    %17 = arith.maximumf %15, %16 : vector<8x256xf32>
    %18 = arith.truncf %17 : vector<8x256xf32> to vector<8x256xbf16>
    %c0_14 = arith.constant 0 : index
    %c0_15 = arith.constant 0 : index
    %19 = vector.load %arg10[%c0_14, %c0_15] : memref<8x256xbf16, #tpu.memory_space<vmem>>, vector<8x256xbf16>
    tpu.vector_store %arg10[%c0_14, %c0_15], %18 {strides = array<i32>} : memref<8x256xbf16, #tpu.memory_space<vmem>>, vector<8x256xbf16>,
    %c0_16 = arith.constant 0 : index
    %c0_17 = arith.constant 0 : index
    %20 = vector.load %arg6[%c0_16, %c0_17] : memref<256x128xbf16, #tpu.memory_space<vmem>>, vector<256x128xbf16>
    %cst_18 = arith.constant dense<0.000000e+00> : vector<8x128xf32>
    %21 = tpu.matmul %18, %20, %cst_18 {dimension_numbers = #tpu.dot_dimension_numbers<[1], [0], [0], [1], [0, 0, 1, 1], [], []>} : vector<8x256xbf16>, vector<256x128xbf16>, vector<8x128xf32> -> vector<8x128xf32>
    %c0_19 = arith.constant 0 : index
    %c0_20 = arith.constant 0 : index
    %22 = vector.load %arg7[%c0_19, %c0_20] : memref<1x128xf32, #tpu.memory_space<vmem>>, vector<1x128xf32>
    %23 = vector.broadcast %22 : vector<1x128xf32> to vector<8x128xf32>
    %24 = arith.addf %21, %23 : vector<8x128xf32>
    %c0_21 = arith.constant 0 : index
    %c0_22 = arith.constant 0 : index
    %25 = vector.load %arg8[%c0_21, %c0_22] : memref<8x128xf32, #tpu.memory_space<vmem>>, vector<8x128xf32>
    tpu.vector_store %arg8[%c0_21, %c0_22], %24 {strides = array<i32>} : memref<8x128xf32, #tpu.memory_space<vmem>>, vector<8x128xf32>,
    return
  }
  func.func @transform_0(%arg0: i32) -> (i32, i32) {
    %c0_i32 = arith.constant 0 : i32
    %c0_i32_0 = arith.constant 0 : i32
    return %arg0, %c0_i32 : i32, i32
  }
  func.func @transform_1(%arg0: i32) -> (i32, i32) {
    %c0_i32 = arith.constant 0 : i32
    %c0_i32_0 = arith.constant 0 : i32
    %c0_i32_1 = arith.constant 0 : i32
    return %c0_i32, %c0_i32_0 : i32, i32
  }
  func.func @transform_2(%arg0: i32) -> (i32, i32) {
    %c0_i32 = arith.constant 0 : i32
    %c0_i32_0 = arith.constant 0 : i32
    %c0_i32_1 = arith.constant 0 : i32
    return %c0_i32, %c0_i32_0 : i32, i32
  }
  func.func @transform_3(%arg0: i32) -> (i32, i32) {
    %c0_i32 = arith.constant 0 : i32
    %c0_i32_0 = arith.constant 0 : i32
    %c0_i32_1 = arith.constant 0 : i32
    return %c0_i32, %c0_i32_0 : i32, i32
  }
  func.func @transform_4(%arg0: i32) -> (i32, i32) {
    %c0_i32 = arith.constant 0 : i32
    %c0_i32_0 = arith.constant 0 : i32
    %c0_i32_1 = arith.constant 0 : i32
    return %c0_i32, %c0_i32_0 : i32, i32
  }
  func.func @transform_5(%arg0: i32) -> (i32, i32) {
    %c0_i32 = arith.constant 0 : i32
    %c0_i32_0 = arith.constant 0 : i32
    %c0_i32_1 = arith.constant 0 : i32
    return %c0_i32, %c0_i32_0 : i32, i32
  }
  func.func @transform_6(%arg0: i32) -> (i32, i32) {
    %c0_i32 = arith.constant 0 : i32
    %c0_i32_0 = arith.constant 0 : i32
    %c0_i32_1 = arith.constant 0 : i32
    return %c0_i32, %c0_i32_0 : i32, i32
  }
  func.func @transform_7(%arg0: i32) -> (i32, i32) {
    %c0_i32 = arith.constant 0 : i32
    %c0_i32_0 = arith.constant 0 : i32
    return %arg0, %c0_i32 : i32, i32
  }
}

</mosaic_0001>

<llo_original>
// kernel: reinforce_net_forward.1
$region0: #{reinforce_net_forward.1}
  #allocation0 [shape = 'u32[]', space=smem, size = 0x4, offset = 0x4, fixed_abs, tag = 'smem constant byte address 0x4 - core index']
  #allocation1 [shape = 'u32[144,128]{1,0:T(1,128)}', space=vmem, size = 0x12000, scoped, tag = 'internal scratch']
  #allocation2 [shape = 'bf16[8,256]{1,0:T(8,128)(2,1)}', space=vmem, size = 0x1000, scoped, tag = 'scratch operand']
  #allocation3 [shape = 'bf16[8,256]{1,0:T(8,128)(2,1)}', space=vmem, size = 0x1000, scoped, tag = 'scratch operand']
  %s0 = inlined_call_operand.hbm [shape: f32[8,16], index: 0, kind: input, shape index: {}]
  %s1 = inlined_call_operand.hbm [shape: bf16[16,256], index: 1, kind: input, shape index: {}]
  %s2 = inlined_call_operand.vmem [shape: f32[1,256], index: 2, kind: input, shape index: {}]
  %s3 = inlined_call_operand.hbm [shape: bf16[256,256], index: 3, kind: input, shape index: {}]
  %s4 = inlined_call_operand.vmem [shape: f32[1,256], index: 4, kind: input, shape index: {}]
  %s5 = inlined_call_operand.hbm [shape: bf16[256,128], index: 5, kind: input, shape index: {}]
  %s6 = inlined_call_operand.vmem [shape: f32[1,128], index: 6, kind: input, shape index: {}]
  %s7 = inlined_call_operand.vmem [shape: f32[8,128], index: 7, kind: output, shape index: {}]
  %s8 = sld [smem:[#allocation0]]
  $region54: #{reinforce_net_forward.1} parent=0
    _
  %s10 = ssub.s32 1, %s8
  %s11 = scalar_select 0, %s10, %s8
  $region1: #{reinforce_net_forward.1} parent=0
    #allocation4 [shape = 'u8[4096]{0}', space=vmem, size = 0x1000, scoped, tag = 'input window, operand 0, single buffered']
    #allocation5 [shape = 's32[1]{0}', space=sflag, size = 0x4, scoped, tag = 'scoped memory for reinforce_net_forward.1']
    #allocation6 [shape = 'u8[8192]{0}', space=vmem, size = 0x2000, scoped, tag = 'input window, operand 1, single buffered']
    #allocation7 [shape = 's32[1]{0}', space=sflag, size = 0x4, scoped, tag = 'scoped memory for reinforce_net_forward.1']
    #allocation8 [shape = 'u8[131072]{0}', space=vmem, size = 0x20000, scoped, tag = 'input window, operand 3, single buffered']
    #allocation9 [shape = 'u8[65536]{0}', space=vmem, size = 0x10000, scoped, tag = 'input window, operand 5, single buffered']
    #allocation10 [shape = 's32[1]{0}', space=sflag, size = 0x4, scoped, tag = 'scoped memory for reinforce_net_forward.1']
    %12 = vsyncpa [#allocation5], 0
    %13 = vsyncpa [#allocation7], 0
    %14 = vsyncpa [#allocation10], 0
    // Predicated region
    $region2: #{reinforce_net_forward.1} parent=1 // pred_check
      _
    $region3: #{reinforce_net_forward.1} parent=1 // pred_check_branch
      %16 = sbr.rel (0) target = $region5
    $region4: #{reinforce_net_forward.1} parent=1 // pred_region
      %s18 = ssub.s32 128, 128
      %19 = vsyncadd [#allocation5], %s18
      %s21 = sshll.u32 [#allocation4], 4
      %s22 = int_to_ptr.vmem [resolvable:$true] %s21
      %24 = dma.hbm_to_vmem [thread:$0]  %s0, 128, %s22, [#allocation5]
    $region5: #{reinforce_net_forward.1} parent=1 // pred_fallthru
      _
    // Predicated region
    $region6: #{reinforce_net_forward.1} parent=1 // pred_check
      _
    $region7: #{reinforce_net_forward.1} parent=1 // pred_check_branch
      %26 = sbr.rel (0) target = $region9
    $region8: #{reinforce_net_forward.1} parent=1 // pred_region
      %s28 = ssub.s32 256, 256
      %29 = vsyncadd [#allocation7], %s28
      %s30 = sshll.u32 [#allocation6], 4
      %s31 = int_to_ptr.vmem [resolvable:$true] %s30
      %36 = dma.hbm_to_vmem [thread:$0]  %s1, 256, %s31, [#allocation7], 128, 128, 8
    $region9: #{reinforce_net_forward.1} parent=1 // pred_fallthru
      _
    // Predicated region
    $region10: #{reinforce_net_forward.1} parent=1 // pred_check
      _
    $region11: #{reinforce_net_forward.1} parent=1 // pred_check_branch
      %38 = sbr.rel (0) target = $region13
    $region12: #{reinforce_net_forward.1} parent=1 // pred_region
      _
    $region13: #{reinforce_net_forward.1} parent=1 // pred_fallthru
      _
    // Predicated region
    $region14: #{reinforce_net_forward.1} parent=1 // pred_check
      _
    $region15: #{reinforce_net_forward.1} parent=1 // pred_check_branch
      %40 = sbr.rel (0) target = $region17
    $region16: #{reinforce_net_forward.1} parent=1 // pred_region
      %s42 = ssub.s32 4096, 4096
      %43 = vsyncadd [#allocation7], %s42
      %s44 = sshll.u32 [#allocation8], 4
      %s45 = int_to_ptr.vmem [resolvable:$true] %s44
      %50 = dma.hbm_to_vmem [thread:$0]  %s3, 4096, %s45, [#allocation7], 128, 128, 8
    $region17: #{reinforce_net_forward.1} parent=1 // pred_fallthru
      _
    // Predicated region
    $region18: #{reinforce_net_forward.1} parent=1 // pred_check
      _
    $region19: #{reinforce_net_forward.1} parent=1 // pred_check_branch
      %52 = sbr.rel (0) target = $region21
    $region20: #{reinforce_net_forward.1} parent=1 // pred_region
      _
    $region21: #{reinforce_net_forward.1} parent=1 // pred_fallthru
      _
    // Predicated region
    $region22: #{reinforce_net_forward.1} parent=1 // pred_check
      _
    $region23: #{reinforce_net_forward.1} parent=1 // pred_check_branch
      %54 = sbr.rel (0) target = $region25
    $region24: #{reinforce_net_forward.1} parent=1 // pred_region
      %s56 = ssub.s32 2048, 2048
      %57 = vsyncadd [#allocation10], %s56
      %s58 = sshll.u32 [#allocation9], 4
      %s59 = int_to_ptr.vmem [resolvable:$true] %s58
      %64 = dma.hbm_to_vmem [thread:$0]  %s5, 2048, %s59, [#allocation10], 64, 64, 4
    $region25: #{reinforce_net_forward.1} parent=1 // pred_fallthru
      _
    // Predicated region
    $region26: #{reinforce_net_forward.1} parent=1 // pred_check
      _
    $region27: #{reinforce_net_forward.1} parent=1 // pred_check_branch
      %66 = sbr.rel (0) target = $region29
    $region28: #{reinforce_net_forward.1} parent=1 // pred_region
      _
    $region29: #{reinforce_net_forward.1} parent=1 // pred_fallthru
      _
    // Predicated region
    $region30: #{reinforce_net_forward.1} parent=1 // pred_check
      _
    $region31: #{reinforce_net_forward.1} parent=1 // pred_check_branch
      %68 = sbr.rel (0) target = $region33
    $region32: #{reinforce_net_forward.1} parent=1 // pred_region
      %69 = dma.done [#allocation5], 128
    $region33: #{reinforce_net_forward.1} parent=1 // pred_fallthru
      _
    // Predicated region
    $region34: #{reinforce_net_forward.1} parent=1 // pred_check
      _
    $region35: #{reinforce_net_forward.1} parent=1 // pred_check_branch
      %71 = sbr.rel (0) target = $region37
    $region36: #{reinforce_net_forward.1} parent=1 // pred_region
      %72 = dma.done [#allocation7], 256
    $region37: #{reinforce_net_forward.1} parent=1 // pred_fallthru
      _
    // Predicated region
    $region38: #{reinforce_net_forward.1} parent=1 // pred_check
      _
    $region39: #{reinforce_net_forward.1} parent=1 // pred_check_branch
      %74 = sbr.rel (0) target = $region41
    $region40: #{reinforce_net_forward.1} parent=1 // pred_region
      %75 = dma.done [#allocation7], 4096
    $region41: #{reinforce_net_forward.1} parent=1 // pred_fallthru
      _
    // Predicated region
    $region42: #{reinforce_net_forward.1} parent=1 // pred_check
      _
    $region43: #{reinforce_net_forward.1} parent=1 // pred_check_branch
      %77 = sbr.rel (0) target = $region45
    $region44: #{reinforce_net_forward.1} parent=1 // pred_region
      %78 = dma.done [#allocation10], 2048
    $region45: #{reinforce_net_forward.1} parent=1 // pred_fallthru
      _
    %v80 = vld [vmem:[#allocation4] sm:$0xff]
    %v81 = vpack.c.bf16 %v80, %v80
    %v82 = vld [vmem:[#allocation6] sm:$0xff]
    %v83 = vld [vmem:[#allocation6 + $0x8] sm:$0xff]
    %v84 = vld [vmem:[%s2] sm:$0x3]
    %v86 = vlaneseq
    %v87 = vshrl.u32 %v86, 7
    %v88 = vsub.s32 0, %v87
    %v89 = vrot.slane %v84, %v88
    %v90 = vlaneseq
    %v91 = vshrl.u32 %v90, 7
    %v92 = vsub.s32 1, %v91
    %v93 = vrot.slane %v84, %v92
    %v98 = vunpack.c.l.b16 %v82
    %v99 = vunpack.c.h.b16 %v82
    %v100 = vunpack.c.l.b16 %v83
    %v101 = vunpack.c.h.b16 %v83
    %v102 = vpack.c.b16 %v100, %v98
    %v103 = vpack.c.b16 %v101, %v99
    %vm106 = vcmask 130048
    %v108 = vsel %vm106, %v81, 0
    %110 = vmatprep.subr.bf16.mxu0 %v103
    %111 = vmatpush1.bf16.msra.mxu0 %v102
    %112 = vmatprep.subr.bf16.mxu0 0
    %113 = vmatpush1.bf16.msra.mxu0 0
    %114 = vmatprep.subr.bf16.mxu0 0
    %115 = vmatpush1.bf16.msra.mxu0 0
    %116 = vmatprep.subr.bf16.mxu0 0
    %117 = vmatpush1.bf16.msra.mxu0 0
    %118 = vmatprep.subr.bf16.mxu0 0
    %119 = vmatpush1.bf16.msra.mxu0 0
    %120 = vmatprep.subr.bf16.mxu0 0
    %121 = vmatpush1.bf16.msra.mxu0 0
    %122 = vmatprep.subr.bf16.mxu0 0
    %123 = vmatpush1.bf16.msra.mxu0 0
    %124 = vmatprep.subr.bf16.mxu0 0
    %125 = vmatpush1.bf16.msra.mxu0 0
    %126 = vmatprep.subr.bf16.mxu0 0
    %127 = vmatpush1.bf16.msra.mxu0 0
    %128 = vmatprep.subr.bf16.mxu0 0
    %129 = vmatpush1.bf16.msra.mxu0 0
    %130 = vmatprep.subr.bf16.mxu0 0
    %131 = vmatpush1.bf16.msra.mxu0 0
    %132 = vmatprep.subr.bf16.mxu0 0
    %133 = vmatpush1.bf16.msra.mxu0 0
    %134 = vmatprep.subr.bf16.mxu0 0
    %135 = vmatpush1.bf16.msra.mxu0 0
    %136 = vmatprep.subr.bf16.mxu0 0
    %137 = vmatpush1.bf16.msra.mxu0 0
    %138 = vmatprep.subr.bf16.mxu0 0
    %139 = vmatpush1.bf16.msra.mxu0 0
    %140 = vmatprep.subr.bf16.mxu0 0
    %141 = vmatpush1.bf16.msra.mxu0 0
    %142 = vmatprep.mubr.bf16.mxu0 0
    %143 = vmatmul.mubr.bf16.gmra.mrb[0].mxu0 %v108
    %v144 = vpop.f32.mrb[0].mxu0
    %v145 = vadd.f32 %v89, %v144
    %v146 = vpop.f32.mrb[0].mxu0
    %v147 = vadd.f32 %v93, %v146
    %v148 = vpop.f32.mrb[0].mxu0
    %v149 = vpop.f32.mrb[0].mxu0
    %150 = vdwg.mxu0
    %v151 = vmax.f32 %v145, 0.0
    %v152 = vmax.f32 %v147, 0.0
    %v153 = vpack.c.bf16 %v151, %v151
    %v154 = vpack.c.bf16 %v152, %v152
    %v157 = vunpack.c.l.b16 %v153
    %v158 = vunpack.c.l.b16 %v154
    %v159 = vpack.c.b16 %v158, %v157
    %161 = vst [vmem:[#allocation2] sm:$0xff] %v159
    %v162 = vld [vmem:[#allocation8] sm:$0xff]
    %v163 = vld [vmem:[#allocation8 + $0x8] sm:$0xff]
    %v164 = vld [vmem:[#allocation8 + $0x10] sm:$0xff]
    %v165 = vld [vmem:[#allocation8 + $0x18] sm:$0xff]
    %v166 = vld [vmem:[#allocation8 + $0x20] sm:$0xff]
    %v167 = vld [vmem:[#allocation8 + $0x28] sm:$0xff]
    %v168 = vld [vmem:[#allocation8 + $0x30] sm:$0xff]
    %v169 = vld [vmem:[#allocation8 + $0x38] sm:$0xff]
    %v170 = vld [vmem:[#allocation8 + $0x40] sm:$0xff]
    %v171 = vld [vmem:[#allocation8 + $0x48] sm:$0xff]
    %v172 = vld [vmem:[#allocation8 + $0x50] sm:$0xff]
    %v173 = vld [vmem:[#allocation8 + $0x58] sm:$0xff]
    %v174 = vld [vmem:[#allocation8 + $0x60] sm:$0xff]
    %v175 = vld [vmem:[#allocation8 + $0x68] sm:$0xff]
    %v176 = vld [vmem:[#allocation8 + $0x70] sm:$0xff]
    %v177 = vld [vmem:[#allocation8 + $0x78] sm:$0xff]
    %v178 = vld [vmem:[#allocation8 + $0x80] sm:$0xff]
    %v179 = vld [vmem:[#allocation8 + $0x88] sm:$0xff]
    %v180 = vld [vmem:[#allocation8 + $0x90] sm:$0xff]
    %v181 = vld [vmem:[#allocation8 + $0x98] sm:$0xff]
    %v182 = vld [vmem:[#allocation8 + $0xa0] sm:$0xff]
    %v183 = vld [vmem:[#allocation8 + $0xa8] sm:$0xff]
    %v184 = vld [vmem:[#allocation8 + $0xb0] sm:$0xff]
    %v185 = vld [vmem:[#allocation8 + $0xb8] sm:$0xff]
    %v186 = vld [vmem:[#allocation8 + $0xc0] sm:$0xff]
    %v187 = vld [vmem:[#allocation8 + $0xc8] sm:$0xff]
    %v188 = vld [vmem:[#allocation8 + $0xd0] sm:$0xff]
    %v189 = vld [vmem:[#allocation8 + $0xd8] sm:$0xff]
    %v190 = vld [vmem:[#allocation8 + $0xe0] sm:$0xff]
    %v191 = vld [vmem:[#allocation8 + $0xe8] sm:$0xff]
    %v192 = vld [vmem:[#allocation8 + $0xf0] sm:$0xff]
    %v193 = vld [vmem:[#allocation8 + $0xf8] sm:$0xff]
    %v194 = vld [vmem:[%s4] sm:$0x3]
    %v196 = vlaneseq
    %v197 = vshrl.u32 %v196, 7
    %v198 = vsub.s32 0, %v197
    %v199 = vrot.slane %v194, %v198
    %v200 = vlaneseq
    %v201 = vshrl.u32 %v200, 7
    %v202 = vsub.s32 1, %v201
    %v203 = vrot.slane %v194, %v202
    %v238 = vunpack.c.l.b16 %v162
    %v239 = vunpack.c.h.b16 %v162
    %v240 = vunpack.c.l.b16 %v163
    %v241 = vunpack.c.h.b16 %v163
    %v242 = vunpack.c.l.b16 %v164
    %v243 = vunpack.c.h.b16 %v164
    %v244 = vunpack.c.l.b16 %v165
    %v245 = vunpack.c.h.b16 %v165
    %v246 = vunpack.c.l.b16 %v166
    %v247 = vunpack.c.h.b16 %v166
    %v248 = vunpack.c.l.b16 %v167
    %v249 = vunpack.c.h.b16 %v167
    %v250 = vunpack.c.l.b16 %v168
    %v251 = vunpack.c.h.b16 %v168
    %v252 = vunpack.c.l.b16 %v169
    %v253 = vunpack.c.h.b16 %v169
    %v254 = vunpack.c.l.b16 %v170
    %v255 = vunpack.c.h.b16 %v170
    %v256 = vunpack.c.l.b16 %v171
    %v257 = vunpack.c.h.b16 %v171
    %v258 = vunpack.c.l.b16 %v172
    %v259 = vunpack.c.h.b16 %v172
    %v260 = vunpack.c.l.b16 %v173
    %v261 = vunpack.c.h.b16 %v173
    %v262 = vunpack.c.l.b16 %v174
    %v263 = vunpack.c.h.b16 %v174
    %v264 = vunpack.c.l.b16 %v175
    %v265 = vunpack.c.h.b16 %v175
    %v266 = vunpack.c.l.b16 %v176
    %v267 = vunpack.c.h.b16 %v176
    %v268 = vunpack.c.l.b16 %v177
    %v269 = vunpack.c.h.b16 %v177
    %v270 = vunpack.c.l.b16 %v178
    %v271 = vunpack.c.h.b16 %v178
    %v272 = vunpack.c.l.b16 %v179
    %v273 = vunpack.c.h.b16 %v179
    %v274 = vunpack.c.l.b16 %v180
    %v275 = vunpack.c.h.b16 %v180
    %v276 = vunpack.c.l.b16 %v181
    %v277 = vunpack.c.h.b16 %v181
    %v278 = vunpack.c.l.b16 %v182
    %v279 = vunpack.c.h.b16 %v182
    %v280 = vunpack.c.l.b16 %v183
    %v281 = vunpack.c.h.b16 %v183
    %v282 = vunpack.c.l.b16 %v184
    %v283 = vunpack.c.h.b16 %v184
    %v284 = vunpack.c.l.b16 %v185
    %v285 = vunpack.c.h.b16 %v185
    %v286 = vunpack.c.l.b16 %v186
    %v287 = vunpack.c.h.b16 %v186
    %v288 = vunpack.c.l.b16 %v187
    %v289 = vunpack.c.h.b16 %v187
    %v290 = vunpack.c.l.b16 %v188
    %v291 = vunpack.c.h.b16 %v188
    %v292 = vunpack.c.l.b16 %v189
    %v293 = vunpack.c.h.b16 %v189
    %v294 = vunpack.c.l.b16 %v190
    %v295 = vunpack.c.h.b16 %v190
    %v296 = vunpack.c.l.b16 %v191
    %v297 = vunpack.c.h.b16 %v191
    %v298 = vunpack.c.l.b16 %v192
    %v299 = vunpack.c.h.b16 %v192
    %v300 = vunpack.c.l.b16 %v193
    %v301 = vunpack.c.h.b16 %v193
    %v302 = vpack.c.b16 %v240, %v238
    %v303 = vpack.c.b16 %v241, %v239
    %v304 = vpack.c.b16 %v244, %v242
    %v305 = vpack.c.b16 %v245, %v243
    %v306 = vpack.c.b16 %v248, %v246
    %v307 = vpack.c.b16 %v249, %v247
    %v308 = vpack.c.b16 %v252, %v250
    %v309 = vpack.c.b16 %v253, %v251
    %v310 = vpack.c.b16 %v256, %v254
    %v311 = vpack.c.b16 %v257, %v255
    %v312 = vpack.c.b16 %v260, %v258
    %v313 = vpack.c.b16 %v261, %v259
    %v314 = vpack.c.b16 %v264, %v262
    %v315 = vpack.c.b16 %v265, %v263
    %v316 = vpack.c.b16 %v268, %v266
    %v317 = vpack.c.b16 %v269, %v267
    %v318 = vpack.c.b16 %v272, %v270
    %v319 = vpack.c.b16 %v273, %v271
    %v320 = vpack.c.b16 %v276, %v274
    %v321 = vpack.c.b16 %v277, %v275
    %v322 = vpack.c.b16 %v280, %v278
    %v323 = vpack.c.b16 %v281, %v279
    %v324 = vpack.c.b16 %v284, %v282
    %v325 = vpack.c.b16 %v285, %v283
    %v326 = vpack.c.b16 %v288, %v286
    %v327 = vpack.c.b16 %v289, %v287
    %v328 = vpack.c.b16 %v292, %v290
    %v329 = vpack.c.b16 %v293, %v291
    %v330 = vpack.c.b16 %v296, %v294
    %v331 = vpack.c.b16 %v297, %v295
    %v332 = vpack.c.b16 %v300, %v298
    %v333 = vpack.c.b16 %v301, %v299
    %366 = vmatprep.subr.bf16.mxu0 %v303
    %367 = vmatpush1.bf16.msra.mxu0 %v302
    %368 = vmatprep.subr.bf16.mxu0 %v305
    %369 = vmatpush1.bf16.msra.mxu0 %v304
    %370 = vmatprep.subr.bf16.mxu0 %v307
    %371 = vmatpush1.bf16.msra.mxu0 %v306
    %372 = vmatprep.subr.bf16.mxu0 %v309
    %373 = vmatpush1.bf16.msra.mxu0 %v308
    %374 = vmatprep.subr.bf16.mxu0 %v311
    %375 = vmatpush1.bf16.msra.mxu0 %v310
    %376 = vmatprep.subr.bf16.mxu0 %v313
    %377 = vmatpush1.bf16.msra.mxu0 %v312
    %378 = vmatprep.subr.bf16.mxu0 %v315
    %379 = vmatpush1.bf16.msra.mxu0 %v314
    %380 = vmatprep.subr.bf16.mxu0 %v317
    %381 = vmatpush1.bf16.msra.mxu0 %v316
    %382 = vmatprep.subr.bf16.mxu0 %v319
    %383 = vmatpush1.bf16.msra.mxu0 %v318
    %384 = vmatprep.subr.bf16.mxu0 %v321
    %385 = vmatpush1.bf16.msra.mxu0 %v320
    %386 = vmatprep.subr.bf16.mxu0 %v323
    %387 = vmatpush1.bf16.msra.mxu0 %v322
    %388 = vmatprep.subr.bf16.mxu0 %v325
    %389 = vmatpush1.bf16.msra.mxu0 %v324
    %390 = vmatprep.subr.bf16.mxu0 %v327
    %391 = vmatpush1.bf16.msra.mxu0 %v326
    %392 = vmatprep.subr.bf16.mxu0 %v329
    %393 = vmatpush1.bf16.msra.mxu0 %v328
    %394 = vmatprep.subr.bf16.mxu0 %v331
    %395 = vmatpush1.bf16.msra.mxu0 %v330
    %396 = vmatprep.subr.bf16.mxu0 %v333
    %397 = vmatpush1.bf16.msra.mxu0 %v332
    %398 = vmatprep.mubr.bf16.mxu0 %v154
    %399 = vmatmul.mubr.bf16.gmra.mrb[0].mxu0 %v153
    %v400 = vpop.f32.mrb[0].mxu0
    %v401 = vadd.f32 %v199, %v400
    %v402 = vpop.f32.mrb[0].mxu0
    %v403 = vadd.f32 %v203, %v402
    %v404 = vpop.f32.mrb[0].mxu0
    %v405 = vpop.f32.mrb[0].mxu0
    %406 = vdwg.mxu0
    %v407 = vmax.f32 %v401, 0.0
    %v408 = vmax.f32 %v403, 0.0
    %v409 = vpack.c.bf16 %v407, %v407
    %v410 = vpack.c.bf16 %v408, %v408
    %v413 = vunpack.c.l.b16 %v409
    %v414 = vunpack.c.l.b16 %v410
    %v415 = vpack.c.b16 %v414, %v413
    %417 = vst [vmem:[#allocation3] sm:$0xff] %v415
    %v418 = vld [vmem:[#allocation9] sm:$0xf]
    %v419 = vld [vmem:[#allocation9 + $0x4] sm:$0xf]
    %v420 = vld [vmem:[#allocation9 + $0x8] sm:$0xf]
    %v421 = vld [vmem:[#allocation9 + $0xc] sm:$0xf]
    %v422 = vld [vmem:[#allocation9 + $0x10] sm:$0xf]
    %v423 = vld [vmem:[#allocation9 + $0x14] sm:$0xf]
    %v424 = vld [vmem:[#allocation9 + $0x18] sm:$0xf]
    %v425 = vld [vmem:[#allocation9 + $0x1c] sm:$0xf]
    %v426 = vld [vmem:[#allocation9 + $0x20] sm:$0xf]
    %v427 = vld [vmem:[#allocation9 + $0x24] sm:$0xf]
    %v428 = vld [vmem:[#allocation9 + $0x28] sm:$0xf]
    %v429 = vld [vmem:[#allocation9 + $0x2c] sm:$0xf]
    %v430 = vld [vmem:[#allocation9 + $0x30] sm:$0xf]
    %v431 = vld [vmem:[#allocation9 + $0x34] sm:$0xf]
    %v432 = vld [vmem:[#allocation9 + $0x38] sm:$0xf]
    %v433 = vld [vmem:[#allocation9 + $0x3c] sm:$0xf]
    %v434 = vld [vmem:[#allocation9 + $0x40] sm:$0xf]
    %v435 = vld [vmem:[#allocation9 + $0x44] sm:$0xf]
    %v436 = vld [vmem:[#allocation9 + $0x48] sm:$0xf]
    %v437 = vld [vmem:[#allocation9 + $0x4c] sm:$0xf]
    %v438 = vld [vmem:[#allocation9 + $0x50] sm:$0xf]
    %v439 = vld [vmem:[#allocation9 + $0x54] sm:$0xf]
    %v440 = vld [vmem:[#allocation9 + $0x58] sm:$0xf]
    %v441 = vld [vmem:[#allocation9 + $0x5c] sm:$0xf]
    %v442 = vld [vmem:[#allocation9 + $0x60] sm:$0xf]
    %v443 = vld [vmem:[#allocation9 + $0x64] sm:$0xf]
    %v444 = vld [vmem:[#allocation9 + $0x68] sm:$0xf]
    %v445 = vld [vmem:[#allocation9 + $0x6c] sm:$0xf]
    %v446 = vld [vmem:[#allocation9 + $0x70] sm:$0xf]
    %v447 = vld [vmem:[#allocation9 + $0x74] sm:$0xf]
    %v448 = vld [vmem:[#allocation9 + $0x78] sm:$0xf]
    %v449 = vld [vmem:[#allocation9 + $0x7c] sm:$0xf]
    %v450 = vld [vmem:[%s6] sm:$0x1]
    %v452 = vlaneseq
    %v453 = vshrl.u32 %v452, 7
    %v454 = vsub.s32 0, %v453
    %v455 = vrot.slane %v450, %v454
    %v489 = vunpack.c.l.b16 %v418
    %v490 = vunpack.c.l.b16 %v419
    %v491 = vunpack.c.l.b16 %v420
    %v492 = vunpack.c.l.b16 %v421
    %v493 = vunpack.c.l.b16 %v422
    %v494 = vunpack.c.l.b16 %v423
    %v495 = vunpack.c.l.b16 %v424
    %v496 = vunpack.c.l.b16 %v425
    %v497 = vunpack.c.l.b16 %v426
    %v498 = vunpack.c.l.b16 %v427
    %v499 = vunpack.c.l.b16 %v428
    %v500 = vunpack.c.l.b16 %v429
    %v501 = vunpack.c.l.b16 %v430
    %v502 = vunpack.c.l.b16 %v431
    %v503 = vunpack.c.l.b16 %v432
    %v504 = vunpack.c.l.b16 %v433
    %v505 = vunpack.c.l.b16 %v434
    %v506 = vunpack.c.l.b16 %v435
    %v507 = vunpack.c.l.b16 %v436
    %v508 = vunpack.c.l.b16 %v437
    %v509 = vunpack.c.l.b16 %v438
    %v510 = vunpack.c.l.b16 %v439
    %v511 = vunpack.c.l.b16 %v440
    %v512 = vunpack.c.l.b16 %v441
    %v513 = vunpack.c.l.b16 %v442
    %v514 = vunpack.c.l.b16 %v443
    %v515 = vunpack.c.l.b16 %v444
    %v516 = vunpack.c.l.b16 %v445
    %v517 = vunpack.c.l.b16 %v446
    %v518 = vunpack.c.l.b16 %v447
    %v519 = vunpack.c.l.b16 %v448
    %v520 = vunpack.c.l.b16 %v449
    %v521 = vpack.c.b16 %v490, %v489
    %v522 = vpack.c.b16 %v492, %v491
    %v523 = vpack.c.b16 %v494, %v493
    %v524 = vpack.c.b16 %v496, %v495
    %v525 = vpack.c.b16 %v498, %v497
    %v526 = vpack.c.b16 %v500, %v499
    %v527 = vpack.c.b16 %v502, %v501
    %v528 = vpack.c.b16 %v504, %v503
    %v529 = vpack.c.b16 %v506, %v505
    %v530 = vpack.c.b16 %v508, %v507
    %v531 = vpack.c.b16 %v510, %v509
    %v532 = vpack.c.b16 %v512, %v511
    %v533 = vpack.c.b16 %v514, %v513
    %v534 = vpack.c.b16 %v516, %v515
    %v535 = vpack.c.b16 %v518, %v517
    %v536 = vpack.c.b16 %v520, %v519
    %553 = vmatprep.subr.bf16.mxu0 0
    %554 = vmatpush1.bf16.msra.mxu0 %v521
    %555 = vmatprep.subr.bf16.mxu0 0
    %556 = vmatpush1.bf16.msra.mxu0 %v522
    %557 = vmatprep.subr.bf16.mxu0 0
    %558 = vmatpush1.bf16.msra.mxu0 %v523
    %559 = vmatprep.subr.bf16.mxu0 0
    %560 = vmatpush1.bf16.msra.mxu0 %v524
    %561 = vmatprep.subr.bf16.mxu0 0
    %562 = vmatpush1.bf16.msra.mxu0 %v525
    %563 = vmatprep.subr.bf16.mxu0 0
    %564 = vmatpush1.bf16.msra.mxu0 %v526
    %565 = vmatprep.subr.bf16.mxu0 0
    %566 = vmatpush1.bf16.msra.mxu0 %v527
    %567 = vmatprep.subr.bf16.mxu0 0
    %568 = vmatpush1.bf16.msra.mxu0 %v528
    %569 = vmatprep.subr.bf16.mxu0 0
    %570 = vmatpush1.bf16.msra.mxu0 %v529
    %571 = vmatprep.subr.bf16.mxu0 0
    %572 = vmatpush1.bf16.msra.mxu0 %v530
    %573 = vmatprep.subr.bf16.mxu0 0
    %574 = vmatpush1.bf16.msra.mxu0 %v531
    %575 = vmatprep.subr.bf16.mxu0 0
    %576 = vmatpush1.bf16.msra.mxu0 %v532
    %577 = vmatprep.subr.bf16.mxu0 0
    %578 = vmatpush1.bf16.msra.mxu0 %v533
    %579 = vmatprep.subr.bf16.mxu0 0
    %580 = vmatpush1.bf16.msra.mxu0 %v534
    %581 = vmatprep.subr.bf16.mxu0 0
    %582 = vmatpush1.bf16.msra.mxu0 %v535
    %583 = vmatprep.subr.bf16.mxu0 0
    %584 = vmatpush1.bf16.msra.mxu0 %v536
    %585 = vmatprep.mubr.bf16.mxu0 %v410
    %586 = vmatmul.mubr.bf16.gmra.mrb[0].mxu0 %v409
    %v587 = vpop.f32.mrb[0].mxu0
    %v588 = vadd.f32 %v455, %v587
    %v589 = vpop.f32.mrb[0].mxu0
    %v590 = vpop.f32.mrb[0].mxu0
    %v591 = vpop.f32.mrb[0].mxu0
    %592 = vdwg.mxu0
    %593 = vst [vmem:[%s7] sm:$0xff] %v588
    // Predicated region
    $region46: #{reinforce_net_forward.1} parent=1 // pred_check
      _
    $region47: #{reinforce_net_forward.1} parent=1 // pred_check_branch
      %595 = sbr.rel (0) target = $region49
    $region48: #{reinforce_net_forward.1} parent=1 // pred_region
      _
    $region49: #{reinforce_net_forward.1} parent=1 // pred_fallthru
      _
    // Predicated region
    $region50: #{reinforce_net_forward.1} parent=1 // pred_check
      _
    $region51: #{reinforce_net_forward.1} parent=1 // pred_check_branch
      %597 = sbr.rel (0) target = $region53
    $region52: #{reinforce_net_forward.1} parent=1 // pred_region
      _
    $region53: #{reinforce_net_forward.1} parent=1 // pred_fallthru
      _
    %598 = vsyncpa [#allocation5], 1
    %599 = vsyncpa [#allocation7], 1
    %600 = vsyncpa [#allocation10], 1

</llo_original>
